<compile_context>
chip_gen: v5e
topology: v5e:2x2
jax: 0.10.0
libtpu: 0.0.40
codegen_flags: <defaults>
</compile_context>

<pallas_src>
from functools import partial

import jax
import jax.numpy as jnp
from jax import lax
from jax.experimental import pallas as pl
from jax.experimental.pallas import tpu as pltpu

_CHUNK = 1024  # inner compute chunk (lanes); multiple of 128


def _round_up(x, m):
    return ((x + m - 1) // m) * m


def _mlp_kernel(x_ref, c_ref, w1xT_ref, w2T_ref, w3T_ref, pvec_ref, o_ref, *, chunk):
    """One row tile.

    x_ref : (tm, D)   native row-major rows of the flattened (B*N, D) input
    c_ref : (1, tm)   per-row conditioning scalar (lane-dense)
    w1xT  : (H, D)    W1 restricted to the x columns, transposed (out, in)
    w2T   : (H, H)    W2 transposed (out, in)
    w3T   : (D, H)    W3 transposed (out, in)
    pvec  : (max(H,D), 6) packed columns: [w1_c, b1, beta1, b2, beta2, b3]
    o_ref : (tm, D)   native row-major output rows
    """
    tm = o_ref.shape[0]
    D = o_ref.shape[1]
    H = w2T_ref.shape[0]
    n_chunks = tm // chunk

    # Resident parameters: load once per grid step, hoisted out of the loop.
    w1x = w1xT_ref[...]                        # (H, D)
    w2 = w2T_ref[...]                          # (H, H)
    w3 = w3T_ref[...]                          # (D, H)
    pv = pvec_ref[...]                         # (max(H,D), 6)
    w1c = pv[:H, 0:1]                          # (H, 1)
    b1 = pv[:H, 1:2]
    beta1 = pv[:H, 2:3]
    b2 = pv[:H, 3:4]
    beta2 = pv[:H, 4:5]
    b3 = pv[:D, 5:6]                           # (D, 1)

    def compute(x_blk, c_blk):
        # x_blk: (chunk, D) row-major, c_blk: (1, chunk).
        # Layer 1, lane-dense: h^T = W1x @ x^T + w1_c * c + b1.  The rhs
        # contraction over the native layout (dim 1 of x) lets Mosaic do the
        # reorientation in VMEM (XLU/MXU), no HBM transpose anywhere.
        h = lax.dot_general(w1x, x_blk, (((1,), (1,)), ((), ())),
                            preferred_element_type=jnp.float32)       # (H, chunk)
        h = h + w1c * c_blk + b1
        h = h * jax.nn.sigmoid(beta1 * h)                              # Swish
        h = jnp.dot(w2, h, preferred_element_type=jnp.float32) + b2    # (H, chunk)
        h = h * jax.nn.sigmoid(beta2 * h)                              # Swish
        outT = jnp.dot(w3, h, preferred_element_type=jnp.float32) + b3  # (D, chunk)
        return outT.T                                                   # (chunk, D)

    if n_chunks == 1:
        o_ref[...] = compute(x_ref[...], c_ref[...]).astype(o_ref.dtype)
    else:
        def body(i, carry):
            s = pl.multiple_of(i * chunk, chunk)
            x_blk = x_ref[pl.ds(s, chunk), :]          # (chunk, D)
            c_blk = c_ref[:, pl.ds(s, chunk)]          # (1, chunk)
            o_ref[pl.ds(s, chunk), :] = compute(x_blk, c_blk).astype(o_ref.dtype)
            return carry

        lax.fori_loop(0, n_chunks, body, 0, unroll=True)


def small_mlp_forward(x, c, params, *, row_tile=8192):
    """x: (B, N, D) f32, c: (B, 1) f32 -> (B, N, D) f32."""
    B, N, D = x.shape
    M = B * N
    H = params["w2"].shape[0]

    # ---- Tile selection ------------------------------------------------
    # tiny M: single block, no padding.  larger M: tiles are multiples of the
    # inner chunk, capped so the grid has >= 2 steps (v7x has 2 TensorCores).
    if M <= _CHUNK:
        tm, m_pad, chunk = M, M, M
    else:
        tm_cap = _round_up(pl.cdiv(M, 2), _CHUNK)
        tm = max(_CHUNK, min(_round_up(row_tile, _CHUNK), tm_cap))
        m_pad = _round_up(M, tm)
        chunk = _CHUNK

    # ---- Inputs in native layout (no HBM transpose) --------------------
    x2d = x.reshape(M, D)                                  # free reshape
    c_row = jnp.broadcast_to(c, (B, N)).reshape(1, M)      # (1, M), tiny
    if m_pad != M:
        pad = m_pad - M
        x2d = jnp.pad(x2d, ((0, pad), (0, 0)))
        c_row = jnp.pad(c_row, ((0, 0), (0, pad)))

    # ---- Parameters: transposed weights + one packed (R, 6) vector -----
    w1 = params["w1"]                                      # (D+1, H), (in, out)
    w1xT = w1[:D, :].T                                     # (H, D)
    w2T = params["w2"].T                                   # (H, H)
    w3T = params["w3"].T                                   # (D, H)
    R = max(H, D)

    def col(v):
        return jnp.pad(v, (0, R - v.shape[0]))

    pvec = jnp.stack(
        [col(w1[D, :]), col(params["b1"][0]), col(params["beta1"][0]),
         col(params["b2"][0]), col(params["beta2"][0]), col(params["b3"][0])],
        axis=1)                                            # (R, 6)

    full = lambda i: (0, 0)

    # Advisory cost estimate (pads included).
    flops = 2 * m_pad * (D * H + H * H + H * D) + 8 * m_pad * H
    bytes_accessed = 4 * (m_pad * (2 * D + 1) + H * (D + H) + D * H + 6 * R)
    cost = pl.CostEstimate(flops=flops, transcendentals=2 * m_pad * H,
                           bytes_accessed=bytes_accessed)

    # Explicit VMEM budget: double-buffered x / out / c tiles (narrow blocks
    # pad their minor dim to 128 lanes in VMEM) plus scratch headroom.
    vmem_limit = int(min(100 * 2**20, max(32 * 2**20, 2112 * tm + 8 * 2**20)))

    out2d = pl.pallas_call(
        partial(_mlp_kernel, chunk=chunk),
        out_shape=jax.ShapeDtypeStruct((m_pad, D), jnp.float32),
        grid=(m_pad // tm,),
        in_specs=[
            pl.BlockSpec((tm, D), lambda i: (i, 0)),       # x rows (native)
            pl.BlockSpec((1, tm), lambda i: (0, i)),       # c row (lane-dense)
            pl.BlockSpec((H, D), full),                    # W1 (x part)^T
            pl.BlockSpec((H, H), full),                    # W2^T
            pl.BlockSpec((D, H), full),                    # W3^T
            pl.BlockSpec((R, 6), full),                    # packed small params
        ],
        out_specs=pl.BlockSpec((tm, D), lambda i: (i, 0)),
        compiler_params=pltpu.CompilerParams(
            dimension_semantics=("parallel",),
            vmem_limit_bytes=vmem_limit),
        cost_estimate=cost,
    )(x2d, c_row, w1xT, w2T, w3T, pvec)

    if m_pad != M:
        out2d = out2d[:M]
    return out2d.reshape(B, N, D)


def init_params(key, in_dim, hidden_dim):
    """Deterministic synthetic parameters (shapes match nn.Linear / Swish)."""
    c_dim = in_dim + 1
    out_dim = in_dim
    k1, k2, k3, k4, k5, k6 = jax.random.split(key, 6)

    def lin(kw, kb, fan_in, fan_out):
        bound = 1.0 / jnp.sqrt(fan_in)
        # stored (in, out) so the reference does x @ W (PyTorch weight.T)
        w = jax.random.uniform(kw, (fan_in, fan_out), jnp.float32, -bound, bound)
        b = jax.random.uniform(kb, (1, fan_out), jnp.float32, -bound, bound)
        return w, b

    w1, b1 = lin(k1, k2, c_dim, hidden_dim)
    w2, b2 = lin(k3, k4, hidden_dim, hidden_dim)
    w3, b3 = lin(k5, k6, hidden_dim, out_dim)
    return {
        "w1": w1, "b1": b1, "beta1": jnp.ones((1, hidden_dim), jnp.float32),
        "w2": w2, "b2": b2, "beta2": jnp.ones((1, hidden_dim), jnp.float32),
        "w3": w3, "b3": b3,
    }


def _reference(x, c, p):
    B, N, D = x.shape
    c_expand = jnp.broadcast_to(c[:, None, :], (B, N, c.shape[-1]))
    h = jnp.concatenate([x, c_expand], axis=2)
    h = h @ p["w1"] + p["b1"][0]
    h = h * jax.nn.sigmoid(p["beta1"][0] * h)
    h = h @ p["w2"] + p["b2"][0]
    h = h * jax.nn.sigmoid(p["beta2"][0] * h)
    return h @ p["w3"] + p["b3"][0]


if __name__ == "__main__":
    key = jax.random.PRNGKey(0)
    kx, kc, kp, kx2, kc2 = jax.random.split(key, 5)

    # Small shape consistent with the module: B=2, N=8, in_dim=3, hidden=32.
    B, N, in_dim, hidden_dim = 2, 8, 3, 32                # M = B*N = 16 rows
    x = jax.random.normal(kx, (B, N, in_dim), jnp.float32)
    c = jax.random.normal(kc, (B, 1), jnp.float32)
    params = init_params(kp, in_dim, hidden_dim)

    fwd = jax.jit(small_mlp_forward)

    out = jax.block_until_ready(fwd(x, c, params))        # single-block path
    ref = _reference(x, c, params)
    assert out.shape == (B, N, in_dim)
    assert jnp.allclose(out, ref, atol=1e-5, rtol=1e-5)

    # Second check: larger M exercises the multi-step grid, the zero-padded
    # ragged last tile and the inner lane-chunk loop (tm=2048, 2 chunks/tile).
    B2, N2 = 2, 1500                                       # M = 3000
    x2 = jax.random.normal(kx2, (B2, N2, in_dim), jnp.float32)
    c2 = jax.random.normal(kc2, (B2, 1), jnp.float32)
    out2 = jax.block_until_ready(fwd(x2, c2, params))
    ref2 = _reference(x2, c2, params)
    assert out2.shape == (B2, N2, in_dim)
    assert jnp.allclose(out2, ref2, atol=1e-5, rtol=1e-5)

    print("KERNEL_OK")
</pallas_src>

<mosaic_0001>
module attributes {stable_mosaic.version = 11 : i64} {
  func.func @_mlp_kernel(%arg0: i32, %arg1: memref<16x3xf32, #tpu.memory_space<vmem>>, %arg2: memref<1x16xf32, #tpu.memory_space<vmem>>, %arg3: memref<32x3xf32, #tpu.memory_space<vmem>>, %arg4: memref<32x32xf32, #tpu.memory_space<vmem>>, %arg5: memref<3x32xf32, #tpu.memory_space<vmem>>, %arg6: memref<32x6xf32, #tpu.memory_space<vmem>>, %arg7: memref<16x3xf32, #tpu.memory_space<vmem>>) attributes {dimension_semantics = [#tpu.dimension_semantics<parallel>], iteration_bounds = array<i64: 1>, scalar_prefetch = 0 : i64, scratch_operands = 0 : i64, tpu.core_type = #tpu.core_type<tc>, window_params = [{transform_indices = @transform_0, window_bounds = array<i64: 16, 3>}, {transform_indices = @transform_1, window_bounds = array<i64: 1, 16>}, {pipeline_mode = #tpu.pipeline_mode<synchronous>, transform_indices = @transform_2, window_bounds = array<i64: 32, 3>}, {pipeline_mode = #tpu.pipeline_mode<synchronous>, transform_indices = @transform_3, window_bounds = array<i64: 32, 32>}, {pipeline_mode = #tpu.pipeline_mode<synchronous>, transform_indices = @transform_4, window_bounds = array<i64: 3, 32>}, {pipeline_mode = #tpu.pipeline_mode<synchronous>, transform_indices = @transform_5, window_bounds = array<i64: 32, 6>}, {transform_indices = @transform_6, window_bounds = array<i64: 16, 3>}]} {
    %c0 = arith.constant 0 : index
    %c0_0 = arith.constant 0 : index
    %0 = vector.load %arg3[%c0, %c0_0] : memref<32x3xf32, #tpu.memory_space<vmem>>, vector<32x3xf32>
    %c0_1 = arith.constant 0 : index
    %c0_2 = arith.constant 0 : index
    %1 = vector.load %arg4[%c0_1, %c0_2] : memref<32x32xf32, #tpu.memory_space<vmem>>, vector<32x32xf32>
    %c0_3 = arith.constant 0 : index
    %c0_4 = arith.constant 0 : index
    %2 = vector.load %arg5[%c0_3, %c0_4] : memref<3x32xf32, #tpu.memory_space<vmem>>, vector<3x32xf32>
    %c0_5 = arith.constant 0 : index
    %c0_6 = arith.constant 0 : index
    %3 = vector.load %arg6[%c0_5, %c0_6] : memref<32x6xf32, #tpu.memory_space<vmem>>, vector<32x6xf32>
    %4 = vector.extract_strided_slice %3 {offsets = [0, 0], sizes = [32, 1], strides = [1, 1]} : vector<32x6xf32> to vector<32x1xf32>
    %5 = vector.extract_strided_slice %3 {offsets = [0, 1], sizes = [32, 1], strides = [1, 1]} : vector<32x6xf32> to vector<32x1xf32>
    %6 = vector.extract_strided_slice %3 {offsets = [0, 2], sizes = [32, 1], strides = [1, 1]} : vector<32x6xf32> to vector<32x1xf32>
    %7 = vector.extract_strided_slice %3 {offsets = [0, 3], sizes = [32, 1], strides = [1, 1]} : vector<32x6xf32> to vector<32x1xf32>
    %8 = vector.extract_strided_slice %3 {offsets = [0, 4], sizes = [32, 1], strides = [1, 1]} : vector<32x6xf32> to vector<32x1xf32>
    %9 = vector.extract_strided_slice %3 {offsets = [0, 5], sizes = [3, 1], strides = [1, 1]} : vector<32x6xf32> to vector<3x1xf32>
    %c0_7 = arith.constant 0 : index
    %c0_8 = arith.constant 0 : index
    %10 = vector.load %arg1[%c0_7, %c0_8] : memref<16x3xf32, #tpu.memory_space<vmem>>, vector<16x3xf32>
    %c0_9 = arith.constant 0 : index
    %c0_10 = arith.constant 0 : index
    %11 = vector.load %arg2[%c0_9, %c0_10] : memref<1x16xf32, #tpu.memory_space<vmem>>, vector<1x16xf32>
    %cst = arith.constant dense<0.000000e+00> : vector<32x16xf32>
    %12 = tpu.matmul %0, %10, %cst {dimension_numbers = #tpu.dot_dimension_numbers<[1], [1], [0], [0], [0, 0, 1, 0], [], []>} : vector<32x3xf32>, vector<16x3xf32>, vector<32x16xf32> -> vector<32x16xf32>
    %13 = vector.broadcast %4 : vector<32x1xf32> to vector<32x16xf32>
    %14 = vector.broadcast %11 : vector<1x16xf32> to vector<32x16xf32>
    %15 = arith.mulf %13, %14 : vector<32x16xf32>
    %16 = arith.addf %12, %15 : vector<32x16xf32>
    %17 = vector.broadcast %5 : vector<32x1xf32> to vector<32x16xf32>
    %18 = arith.addf %16, %17 : vector<32x16xf32>
    %19 = vector.broadcast %6 : vector<32x1xf32> to vector<32x16xf32>
    %20 = arith.mulf %19, %18 : vector<32x16xf32>
    %21 = arith.negf %20 : vector<32x16xf32>
    %22 = math.exp %21 : vector<32x16xf32>
    %cst_11 = arith.constant 1.000000e+00 : f32
    %23 = vector.broadcast %cst_11 : f32 to vector<32x16xf32>
    %24 = arith.addf %23, %22 : vector<32x16xf32>
    %25 = arith.divf %23, %24 : vector<32x16xf32>
    %26 = arith.mulf %18, %25 : vector<32x16xf32>
    %cst_12 = arith.constant dense<0.000000e+00> : vector<32x16xf32>
    %27 = tpu.matmul %1, %26, %cst_12 {dimension_numbers = #tpu.dot_dimension_numbers<[1], [0], [0], [1], [0, 0, 1, 1], [], []>} : vector<32x32xf32>, vector<32x16xf32>, vector<32x16xf32> -> vector<32x16xf32>
    %28 = vector.broadcast %7 : vector<32x1xf32> to vector<32x16xf32>
    %29 = arith.addf %27, %28 : vector<32x16xf32>
    %30 = vector.broadcast %8 : vector<32x1xf32> to vector<32x16xf32>
    %31 = arith.mulf %30, %29 : vector<32x16xf32>
    %32 = arith.negf %31 : vector<32x16xf32>
    %33 = math.exp %32 : vector<32x16xf32>
    %cst_13 = arith.constant 1.000000e+00 : f32
    %34 = vector.broadcast %cst_13 : f32 to vector<32x16xf32>
    %35 = arith.addf %34, %33 : vector<32x16xf32>
    %36 = arith.divf %34, %35 : vector<32x16xf32>
    %37 = arith.mulf %29, %36 : vector<32x16xf32>
    %cst_14 = arith.constant dense<0.000000e+00> : vector<3x16xf32>
    %38 = tpu.matmul %2, %37, %cst_14 {dimension_numbers = #tpu.dot_dimension_numbers<[1], [0], [0], [1], [0, 0, 1, 1], [], []>} : vector<3x32xf32>, vector<32x16xf32>, vector<3x16xf32> -> vector<3x16xf32>
    %39 = vector.broadcast %9 : vector<3x1xf32> to vector<3x16xf32>
    %40 = arith.addf %38, %39 : vector<3x16xf32>
    %41 = tpu.transpose %40, [1, 0] : vector<3x16xf32> -> vector<16x3xf32>
    %c0_15 = arith.constant 0 : index
    %c0_16 = arith.constant 0 : index
    %42 = vector.load %arg7[%c0_15, %c0_16] : memref<16x3xf32, #tpu.memory_space<vmem>>, vector<16x3xf32>
    tpu.vector_store %arg7[%c0_15, %c0_16], %41 {strides = array<i32>} : memref<16x3xf32, #tpu.memory_space<vmem>>, vector<16x3xf32>,
    return
  }
  func.func @transform_0(%arg0: i32) -> (i32, i32) {
    %c0_i32 = arith.constant 0 : i32
    %c0_i32_0 = arith.constant 0 : i32
    return %arg0, %c0_i32 : i32, i32
  }
  func.func @transform_1(%arg0: i32) -> (i32, i32) {
    %c0_i32 = arith.constant 0 : i32
    %c0_i32_0 = arith.constant 0 : i32
    return %c0_i32, %arg0 : i32, i32
  }
  func.func @transform_2(%arg0: i32) -> (i32, i32) {
    %c0_i32 = arith.constant 0 : i32
    %c0_i32_0 = arith.constant 0 : i32
    %c0_i32_1 = arith.constant 0 : i32
    return %c0_i32, %c0_i32_0 : i32, i32
  }
  func.func @transform_3(%arg0: i32) -> (i32, i32) {
    %c0_i32 = arith.constant 0 : i32
    %c0_i32_0 = arith.constant 0 : i32
    %c0_i32_1 = arith.constant 0 : i32
    return %c0_i32, %c0_i32_0 : i32, i32
  }
  func.func @transform_4(%arg0: i32) -> (i32, i32) {
    %c0_i32 = arith.constant 0 : i32
    %c0_i32_0 = arith.constant 0 : i32
    %c0_i32_1 = arith.constant 0 : i32
    return %c0_i32, %c0_i32_0 : i32, i32
  }
  func.func @transform_5(%arg0: i32) -> (i32, i32) {
    %c0_i32 = arith.constant 0 : i32
    %c0_i32_0 = arith.constant 0 : i32
    %c0_i32_1 = arith.constant 0 : i32
    return %c0_i32, %c0_i32_0 : i32, i32
  }
  func.func @transform_6(%arg0: i32) -> (i32, i32) {
    %c0_i32 = arith.constant 0 : i32
    %c0_i32_0 = arith.constant 0 : i32
    return %arg0, %c0_i32 : i32, i32
  }
}

</mosaic_0001>

<llo_original>
// kernel: small_mlp_forward.1
$region0: #{small_mlp_forward.1}
  #allocation0 [shape = 'u32[]', space=smem, size = 0x4, offset = 0x4, fixed_abs, tag = 'smem constant byte address 0x4 - core index']
  #allocation1 [shape = 'u32[72,128]{1,0:T(1,128)}', space=vmem, size = 0x9000, scoped, tag = 'internal scratch']
  %s0 = inlined_call_operand.vmem [shape: f32[16,3], index: 0, kind: input, shape index: {}]
  %s1 = inlined_call_operand.vmem [shape: f32[1,16], index: 1, kind: input, shape index: {}]
  %s2 = inlined_call_operand.vmem [shape: f32[32,3], index: 2, kind: input, shape index: {}]
  %s3 = inlined_call_operand.vmem [shape: f32[32,32], index: 3, kind: input, shape index: {}]
  %s4 = inlined_call_operand.vmem [shape: f32[3,32], index: 4, kind: input, shape index: {}]
  %s5 = inlined_call_operand.vmem [shape: f32[32,6], index: 5, kind: input, shape index: {}]
  %s6 = inlined_call_operand.vmem [shape: f32[16,3], index: 6, kind: output, shape index: {}]
  %s7 = sld [smem:[#allocation0]]
  $region34: #{small_mlp_forward.1} parent=0
    _
  %s9 = ssub.s32 1, %s7
  %s10 = scalar_select 0, %s9, %s7
  // Predicated region
  $region2: #{small_mlp_forward.1} parent=0 // pred_check
    _
  $region3: #{small_mlp_forward.1} parent=0 // pred_check_branch
    %12 = sbr.rel (0) target = $region5
  $region4: #{small_mlp_forward.1} parent=0 // pred_region
    _
  $region5: #{small_mlp_forward.1} parent=0 // pred_fallthru
    _
  // Predicated region
  $region6: #{small_mlp_forward.1} parent=0 // pred_check
    _
  $region7: #{small_mlp_forward.1} parent=0 // pred_check_branch
    %14 = sbr.rel (0) target = $region9
  $region8: #{small_mlp_forward.1} parent=0 // pred_region
    _
  $region9: #{small_mlp_forward.1} parent=0 // pred_fallthru
    _
  // Predicated region
  $region10: #{small_mlp_forward.1} parent=0 // pred_check
    _
  $region11: #{small_mlp_forward.1} parent=0 // pred_check_branch
    %16 = sbr.rel (0) target = $region13
  $region12: #{small_mlp_forward.1} parent=0 // pred_region
    _
  $region13: #{small_mlp_forward.1} parent=0 // pred_fallthru
    _
  // Predicated region
  $region14: #{small_mlp_forward.1} parent=0 // pred_check
    _
  $region15: #{small_mlp_forward.1} parent=0 // pred_check_branch
    %18 = sbr.rel (0) target = $region17
  $region16: #{small_mlp_forward.1} parent=0 // pred_region
    _
  $region17: #{small_mlp_forward.1} parent=0 // pred_fallthru
    _
  // Predicated region
  $region18: #{small_mlp_forward.1} parent=0 // pred_check
    _
  $region19: #{small_mlp_forward.1} parent=0 // pred_check_branch
    %20 = sbr.rel (0) target = $region21
  $region20: #{small_mlp_forward.1} parent=0 // pred_region
    _
  $region21: #{small_mlp_forward.1} parent=0 // pred_fallthru
    _
  // Predicated region
  $region22: #{small_mlp_forward.1} parent=0 // pred_check
    _
  $region23: #{small_mlp_forward.1} parent=0 // pred_check_branch
    %22 = sbr.rel (0) target = $region25
  $region24: #{small_mlp_forward.1} parent=0 // pred_region
    _
  $region25: #{small_mlp_forward.1} parent=0 // pred_fallthru
    _
  %v23 = vld [vmem:[%s2] sm:$0xff]
  %v24 = vld [vmem:[%s2 + $0x8] sm:$0xff]
  %v25 = vld [vmem:[%s2 + $0x10] sm:$0xff]
  %v26 = vld [vmem:[%s2 + $0x18] sm:$0xff]
  %v27 = vld [vmem:[%s3] sm:$0xff]
  %v28 = vld [vmem:[%s3 + $0x8] sm:$0xff]
  %v29 = vld [vmem:[%s3 + $0x10] sm:$0xff]
  %v30 = vld [vmem:[%s3 + $0x18] sm:$0xff]
  %v31 = vld [vmem:[%s4] sm:$0x7]
  %v32 = vld [vmem:[%s5] sm:$0xff]
  %v33 = vld [vmem:[%s5 + $0x8] sm:$0xff]
  %v34 = vld [vmem:[%s5 + $0x10] sm:$0xff]
  %v35 = vld [vmem:[%s5 + $0x18] sm:$0xff]
  %v36 = vld [vmem:[%s0] sm:$0xff]
  %v37 = vld [vmem:[%s0 + $0x8] sm:$0xff]
  %v38 = vld [vmem:[%s1] sm:$0x1]
  %40 = vset.pattern.permute.xlu0 0
  %41 = vperm.xlu0 %40, %v32
  %v42 = vpop.permute.xlu0 %41
  %45 = vset.pattern.permute.xlu0 0
  %46 = vperm.xlu0 %45, %v33
  %v47 = vpop.permute.xlu0 %46
  %50 = vset.pattern.permute.xlu0 0
  %51 = vperm.xlu0 %50, %v34
  %v52 = vpop.permute.xlu0 %51
  %55 = vset.pattern.permute.xlu0 0
  %56 = vperm.xlu0 %55, %v35
  %v57 = vpop.permute.xlu0 %56
  %v60 = vperm.slane %v38, 0
  %v62 = vmul.f32 %v42, %v60
  %v63 = vmul.f32 %v47, %v60
  %v64 = vmul.f32 %v52, %v60
  %v65 = vmul.f32 %v57, %v60
  %vm66 = vcmask 23552
  %v68 = vsel %vm66, %v23, 0
  %v71 = vsel %vm66, %v24, 0
  %v74 = vsel %vm66, %v25, 0
  %v77 = vsel %vm66, %v26, 0
  %v80 = vsel %vm66, %v36, 0
  %v83 = vsel %vm66, %v37, 0
  %85 = vmatpush.xpose.msra.mxu0 0.0
  %86 = vmatpush.xpose.msra.mxu0 0.0
  %87 = vmatpush.xpose.msra.mxu0 0.0
  %88 = vmatpush.xpose.msra.mxu0 0.0
  %89 = vmatpush.xpose.msra.mxu0 0.0
  %90 = vmatpush.xpose.msra.mxu0 0.0
  %91 = vmatpush.xpose.msra.mxu0 0.0
  %92 = vmatpush.xpose.msra.mxu0 0.0
  %93 = vmatpush.xpose.msra.mxu0 0.0
  %94 = vmatpush.xpose.msra.mxu0 0.0
  %95 = vmatpush.xpose.msra.mxu0 0.0
  %96 = vmatpush.xpose.msra.mxu0 0.0
  %97 = vmatpush.xpose.msra.mxu0 0.0
  %98 = vmatpush.xpose.msra.mxu0 0.0
  %99 = vmatpush.xpose.msra.mxu0 %v83
  %100 = vmatpush.xpose.msra.mxu0 %v80
  %101 = vmatmul.f32.gmra.mxu0 %v68
  %v102 = vpop.f32.mrf.mxu0
  %v103 = vadd.f32 %v62, %v102
  %104 = vmatmul.f32.gmra.mxu0 %v71
  %v105 = vpop.f32.mrf.mxu0
  %v106 = vadd.f32 %v63, %v105
  %107 = vmatmul.f32.gmra.mxu0 %v74
  %v108 = vpop.f32.mrf.mxu0
  %v109 = vadd.f32 %v64, %v108
  %110 = vmatmul.f32.gmra.mxu0 %v77
  %v111 = vpop.f32.mrf.mxu0
  %v112 = vadd.f32 %v65, %v111
  %113 = vdwg.mxu0
  %114 = vset.pattern.permute.xlu0 1
  %115 = vperm.xlu0 %114, %v32
  %v116 = vpop.permute.xlu0 %115
  %118 = vset.pattern.permute.xlu0 1
  %119 = vperm.xlu0 %118, %v33
  %v120 = vpop.permute.xlu0 %119
  %122 = vset.pattern.permute.xlu0 1
  %123 = vperm.xlu0 %122, %v34
  %v124 = vpop.permute.xlu0 %123
  %126 = vset.pattern.permute.xlu0 1
  %127 = vperm.xlu0 %126, %v35
  %v128 = vpop.permute.xlu0 %127
  %v130 = vadd.f32 %v103, %v116
  %v131 = vadd.f32 %v106, %v120
  %v132 = vadd.f32 %v109, %v124
  %v133 = vadd.f32 %v112, %v128
  %134 = vset.pattern.permute.xlu0 2
  %135 = vperm.xlu0 %134, %v32
  %v136 = vpop.permute.xlu0 %135
  %138 = vset.pattern.permute.xlu0 2
  %139 = vperm.xlu0 %138, %v33
  %v140 = vpop.permute.xlu0 %139
  %142 = vset.pattern.permute.xlu0 2
  %143 = vperm.xlu0 %142, %v34
  %v144 = vpop.permute.xlu0 %143
  %146 = vset.pattern.permute.xlu0 2
  %147 = vperm.xlu0 %146, %v35
  %v148 = vpop.permute.xlu0 %147
  %v150 = vmul.f32 %v136, %v130
  %v151 = vmul.f32 %v140, %v131
  %v152 = vmul.f32 %v144, %v132
  %v153 = vmul.f32 %v148, %v133
  %v154 = vxor.u32 %v150, 2147483648
  %v155 = vxor.u32 %v151, 2147483648
  %v156 = vxor.u32 %v152, 2147483648
  %v157 = vxor.u32 %v153, 2147483648
  %v158 = vmul.f32 %v154, 1.442695
  %v159 = vpow.pop %v158
  %v160 = vmul.f32 %v155, 1.442695
  %v161 = vpow.pop %v160
  %v162 = vmul.f32 %v156, 1.442695
  %v163 = vpow.pop %v162
  %v164 = vmul.f32 %v157, 1.442695
  %v165 = vpow.pop %v164
  %v166 = vadd.f32 %v159, 1.0
  %v167 = vadd.f32 %v161, 1.0
  %v168 = vadd.f32 %v163, 1.0
  %v169 = vadd.f32 %v165, 1.0
  %v170 = vrcp.pop %v166
  %v171 = vmul.f32 %v166, %v170
  %v172 = vsub.f32 1.0, %v171
  %v173 = vmul.f32 %v170, %v172
  %v174 = vadd.f32 %v170, %v173
  %vm175 = vweird.f32 %v166
  %vm176 = vweird.f32 %v170
  %vm177 = vmor %vm175, %vm176
  %v178 = vsel %vm177, %v170, %v174
  %v179 = vand.u32 2147483647, %v166
  %vm180 = vcmp.eq.f32.partialorder %v179, 8.507059e+37
  %v181 = vand.u32 %v166, 2147483648
  %v182 = vor.u32 1.1754944e-38, %v181
  %v183 = vsel %vm180, %v182, %v178
  %v184 = vmul.f32 1.0, %v183
  %v185 = vrcp.pop %v167
  %v186 = vmul.f32 %v167, %v185
  %v187 = vsub.f32 1.0, %v186
  %v188 = vmul.f32 %v185, %v187
  %v189 = vadd.f32 %v185, %v188
  %vm190 = vweird.f32 %v167
  %vm191 = vweird.f32 %v185
  %vm192 = vmor %vm190, %vm191
  %v193 = vsel %vm192, %v185, %v189
  %v194 = vand.u32 2147483647, %v167
  %vm195 = vcmp.eq.f32.partialorder %v194, 8.507059e+37
  %v196 = vand.u32 %v167, 2147483648
  %v197 = vor.u32 1.1754944e-38, %v196
  %v198 = vsel %vm195, %v197, %v193
  %v199 = vmul.f32 1.0, %v198
  %v200 = vrcp.pop %v168
  %v201 = vmul.f32 %v168, %v200
  %v202 = vsub.f32 1.0, %v201
  %v203 = vmul.f32 %v200, %v202
  %v204 = vadd.f32 %v200, %v203
  %vm205 = vweird.f32 %v168
  %vm206 = vweird.f32 %v200
  %vm207 = vmor %vm205, %vm206
  %v208 = vsel %vm207, %v200, %v204
  %v209 = vand.u32 2147483647, %v168
  %vm210 = vcmp.eq.f32.partialorder %v209, 8.507059e+37
  %v211 = vand.u32 %v168, 2147483648
  %v212 = vor.u32 1.1754944e-38, %v211
  %v213 = vsel %vm210, %v212, %v208
  %v214 = vmul.f32 1.0, %v213
  %v215 = vrcp.pop %v169
  %v216 = vmul.f32 %v169, %v215
  %v217 = vsub.f32 1.0, %v216
  %v218 = vmul.f32 %v215, %v217
  %v219 = vadd.f32 %v215, %v218
  %vm220 = vweird.f32 %v169
  %vm221 = vweird.f32 %v215
  %vm222 = vmor %vm220, %vm221
  %v223 = vsel %vm222, %v215, %v219
  %v224 = vand.u32 2147483647, %v169
  %vm225 = vcmp.eq.f32.partialorder %v224, 8.507059e+37
  %v226 = vand.u32 %v169, 2147483648
  %v227 = vor.u32 1.1754944e-38, %v226
  %v228 = vsel %vm225, %v227, %v223
  %v229 = vmul.f32 1.0, %v228
  %v230 = vmul.f32 %v130, %v184
  %v231 = vmul.f32 %v131, %v199
  %v232 = vmul.f32 %v132, %v214
  %v233 = vmul.f32 %v133, %v229
  %234 = vset.pattern.permute.xlu0 3
  %235 = vperm.xlu0 %234, %v32
  %v236 = vpop.permute.xlu0 %235
  %238 = vset.pattern.permute.xlu0 3
  %239 = vperm.xlu0 %238, %v33
  %v240 = vpop.permute.xlu0 %239
  %242 = vset.pattern.permute.xlu0 3
  %243 = vperm.xlu0 %242, %v34
  %v244 = vpop.permute.xlu0 %243
  %246 = vset.pattern.permute.xlu0 3
  %247 = vperm.xlu0 %246, %v35
  %v248 = vpop.permute.xlu0 %247
  %vm250 = vcmask 261120
  %v252 = vsel %vm250, %v27, 0
  %v255 = vsel %vm250, %v28, 0
  %v258 = vsel %vm250, %v29, 0
  %v261 = vsel %vm250, %v30, 0
  %263 = vmatpush.msra.mxu0 0.0
  %264 = vmatpush.msra.mxu0 0.0
  %265 = vmatpush.msra.mxu0 0.0
  %266 = vmatpush.msra.mxu0 0.0
  %267 = vmatpush.msra.mxu0 0.0
  %268 = vmatpush.msra.mxu0 0.0
  %269 = vmatpush.msra.mxu0 0.0
  %270 = vmatpush.msra.mxu0 0.0
  %271 = vmatpush.msra.mxu0 0.0
  %272 = vmatpush.msra.mxu0 0.0
  %273 = vmatpush.msra.mxu0 0.0
  %274 = vmatpush.msra.mxu0 0.0
  %275 = vmatpush.msra.mxu0 %v233
  %276 = vmatpush.msra.mxu0 %v232
  %277 = vmatpush.msra.mxu0 %v231
  %278 = vmatpush.msra.mxu0 %v230
  %279 = vmatmul.f32.gmra.mxu0 %v252
  %v280 = vpop.f32.mrf.mxu0
  %v281 = vadd.f32 %v236, %v280
  %282 = vmatmul.f32.gmra.mxu0 %v255
  %v283 = vpop.f32.mrf.mxu0
  %v284 = vadd.f32 %v240, %v283
  %285 = vmatmul.f32.gmra.mxu0 %v258
  %v286 = vpop.f32.mrf.mxu0
  %v287 = vadd.f32 %v244, %v286
  %288 = vmatmul.f32.gmra.mxu0 %v261
  %v289 = vpop.f32.mrf.mxu0
  %v290 = vadd.f32 %v248, %v289
  %291 = vdwg.mxu0
  %292 = vset.pattern.permute.xlu0 4
  %293 = vperm.xlu0 %292, %v32
  %v294 = vpop.permute.xlu0 %293
  %296 = vset.pattern.permute.xlu0 4
  %297 = vperm.xlu0 %296, %v33
  %v298 = vpop.permute.xlu0 %297
  %300 = vset.pattern.permute.xlu0 4
  %301 = vperm.xlu0 %300, %v34
  %v302 = vpop.permute.xlu0 %301
  %304 = vset.pattern.permute.xlu0 4
  %305 = vperm.xlu0 %304, %v35
  %v306 = vpop.permute.xlu0 %305
  %v308 = vmul.f32 %v294, %v281
  %v309 = vmul.f32 %v298, %v284
  %v310 = vmul.f32 %v302, %v287
  %v311 = vmul.f32 %v306, %v290
  %v312 = vxor.u32 %v308, 2147483648
  %v313 = vxor.u32 %v309, 2147483648
  %v314 = vxor.u32 %v310, 2147483648
  %v315 = vxor.u32 %v311, 2147483648
  %v316 = vmul.f32 %v312, 1.442695
  %v317 = vpow.pop %v316
  %v318 = vmul.f32 %v313, 1.442695
  %v319 = vpow.pop %v318
  %v320 = vmul.f32 %v314, 1.442695
  %v321 = vpow.pop %v320
  %v322 = vmul.f32 %v315, 1.442695
  %v323 = vpow.pop %v322
  %v324 = vadd.f32 %v317, 1.0
  %v325 = vadd.f32 %v319, 1.0
  %v326 = vadd.f32 %v321, 1.0
  %v327 = vadd.f32 %v323, 1.0
  %v328 = vrcp.pop %v324
  %v329 = vmul.f32 %v324, %v328
  %v330 = vsub.f32 1.0, %v329
  %v331 = vmul.f32 %v328, %v330
  %v332 = vadd.f32 %v328, %v331
  %vm333 = vweird.f32 %v324
  %vm334 = vweird.f32 %v328
  %vm335 = vmor %vm333, %vm334
  %v336 = vsel %vm335, %v328, %v332
  %v337 = vand.u32 2147483647, %v324
  %vm338 = vcmp.eq.f32.partialorder %v337, 8.507059e+37
  %v339 = vand.u32 %v324, 2147483648
  %v340 = vor.u32 1.1754944e-38, %v339
  %v341 = vsel %vm338, %v340, %v336
  %v342 = vmul.f32 1.0, %v341
  %v343 = vrcp.pop %v325
  %v344 = vmul.f32 %v325, %v343
  %v345 = vsub.f32 1.0, %v344
  %v346 = vmul.f32 %v343, %v345
  %v347 = vadd.f32 %v343, %v346
  %vm348 = vweird.f32 %v325
  %vm349 = vweird.f32 %v343
  %vm350 = vmor %vm348, %vm349
  %v351 = vsel %vm350, %v343, %v347
  %v352 = vand.u32 2147483647, %v325
  %vm353 = vcmp.eq.f32.partialorder %v352, 8.507059e+37
  %v354 = vand.u32 %v325, 2147483648
  %v355 = vor.u32 1.1754944e-38, %v354
  %v356 = vsel %vm353, %v355, %v351
  %v357 = vmul.f32 1.0, %v356
  %v358 = vrcp.pop %v326
  %v359 = vmul.f32 %v326, %v358
  %v360 = vsub.f32 1.0, %v359
  %v361 = vmul.f32 %v358, %v360
  %v362 = vadd.f32 %v358, %v361
  %vm363 = vweird.f32 %v326
  %vm364 = vweird.f32 %v358
  %vm365 = vmor %vm363, %vm364
  %v366 = vsel %vm365, %v358, %v362
  %v367 = vand.u32 2147483647, %v326
  %vm368 = vcmp.eq.f32.partialorder %v367, 8.507059e+37
  %v369 = vand.u32 %v326, 2147483648
  %v370 = vor.u32 1.1754944e-38, %v369
  %v371 = vsel %vm368, %v370, %v366
  %v372 = vmul.f32 1.0, %v371
  %v373 = vrcp.pop %v327
  %v374 = vmul.f32 %v327, %v373
  %v375 = vsub.f32 1.0, %v374
  %v376 = vmul.f32 %v373, %v375
  %v377 = vadd.f32 %v373, %v376
  %vm378 = vweird.f32 %v327
  %vm379 = vweird.f32 %v373
  %vm380 = vmor %vm378, %vm379
  %v381 = vsel %vm380, %v373, %v377
  %v382 = vand.u32 2147483647, %v327
  %vm383 = vcmp.eq.f32.partialorder %v382, 8.507059e+37
  %v384 = vand.u32 %v327, 2147483648
  %v385 = vor.u32 1.1754944e-38, %v384
  %v386 = vsel %vm383, %v385, %v381
  %v387 = vmul.f32 1.0, %v386
  %v388 = vmul.f32 %v281, %v342
  %v389 = vmul.f32 %v284, %v357
  %v390 = vmul.f32 %v287, %v372
  %v391 = vmul.f32 %v290, %v387
  %392 = vset.pattern.permute.xlu0 5
  %393 = vperm.xlu0 %392, %v32
  %v394 = vpop.permute.xlu0 %393
  %v397 = vsel %vm250, %v31, 0
  %399 = vmatpush.msra.mxu0 0.0
  %400 = vmatpush.msra.mxu0 0.0
  %401 = vmatpush.msra.mxu0 0.0
  %402 = vmatpush.msra.mxu0 0.0
  %403 = vmatpush.msra.mxu0 0.0
  %404 = vmatpush.msra.mxu0 0.0
  %405 = vmatpush.msra.mxu0 0.0
  %406 = vmatpush.msra.mxu0 0.0
  %407 = vmatpush.msra.mxu0 0.0
  %408 = vmatpush.msra.mxu0 0.0
  %409 = vmatpush.msra.mxu0 0.0
  %410 = vmatpush.msra.mxu0 0.0
  %411 = vmatpush.msra.mxu0 %v391
  %412 = vmatpush.msra.mxu0 %v390
  %413 = vmatpush.msra.mxu0 %v389
  %414 = vmatpush.msra.mxu0 %v388
  %415 = vmatmul.f32.gmra.mxu0 %v397
  %v416 = vpop.f32.mrf.mxu0
  %v417 = vadd.f32 %v394, %v416
  %418 = vdwg.mxu0
  %419 = vxpose.xlu0.b32.start [1/16] %v417, 128
  %420 = vxpose.xlu0.b32.cont [2/16] 0.0, 128
  %421 = vxpose.xlu0.b32.cont [3/16] 0.0, 128
  %422 = vxpose.xlu0.b32.cont [4/16] 0.0, 128
  %423 = vxpose.xlu0.b32.cont [5/16] 0.0, 128
  %424 = vxpose.xlu0.b32.cont [6/16] 0.0, 128
  %425 = vxpose.xlu0.b32.cont [7/16] 0.0, 128
  %426 = vxpose.xlu0.b32.cont [8/16] 0.0, 128
  %427 = vxpose.xlu0.b32.cont [9/16] 0.0, 128
  %428 = vxpose.xlu0.b32.cont [10/16] 0.0, 128
  %429 = vxpose.xlu0.b32.cont [11/16] 0.0, 128
  %430 = vxpose.xlu0.b32.cont [12/16] 0.0, 128
  %431 = vxpose.xlu0.b32.cont [13/16] 0.0, 128
  %432 = vxpose.xlu0.b32.cont [14/16] 0.0, 128
  %433 = vxpose.xlu0.b32.cont [15/16] 0.0, 128
  %434 = vxpose.xlu0.b32.end [16/16] 0.0, 128
  %v435 = vpop.trf.xlu0
  %v436 = vpop.trf.xlu0
  %v437 = vpop.trf.xlu0
  %v438 = vpop.trf.xlu0
  %v439 = vpop.trf.xlu0
  %v440 = vpop.trf.xlu0
  %v441 = vpop.trf.xlu0
  %v442 = vpop.trf.xlu0
  %v443 = vpop.trf.xlu0
  %v444 = vpop.trf.xlu0
  %v445 = vpop.trf.xlu0
  %v446 = vpop.trf.xlu0
  %v447 = vpop.trf.xlu0
  %v448 = vpop.trf.xlu0
  %v449 = vpop.trf.xlu0
  %v450 = vpop.trf.xlu0
  %451 = vst.msk [vmem:[%s6] sm:$0xff] %vm66, %v435
  %452 = vst.msk [vmem:[%s6 + $0x8] sm:$0xff] %vm66, %v436
  // Predicated region
  $region26: #{small_mlp_forward.1} parent=0 // pred_check
    _
  $region27: #{small_mlp_forward.1} parent=0 // pred_check_branch
    %454 = sbr.rel (0) target = $region29
  $region28: #{small_mlp_forward.1} parent=0 // pred_region
    _
  $region29: #{small_mlp_forward.1} parent=0 // pred_fallthru
    _
  // Predicated region
  $region30: #{small_mlp_forward.1} parent=0 // pred_check
    _
  $region31: #{small_mlp_forward.1} parent=0 // pred_check_branch
    %456 = sbr.rel (0) target = $region33
  $region32: #{small_mlp_forward.1} parent=0 // pred_region
    _
  $region33: #{small_mlp_forward.1} parent=0 // pred_fallthru
    _

</llo_original>
